<compile_context>
chip_gen: v6e
topology: v6e:2x2x1
jax: 0.10.0
libtpu: 0.0.40
codegen_flags: <defaults>
</compile_context>

<pallas_src>
import jax
import jax.numpy as jnp
from jax.experimental import pallas as pl
from jax.experimental.pallas import tpu as pltpu

_LANE = 128


def _elo_kernel(k_ref, home_ref, away_ref, out_ref):
    """One (C, TN) lane-tile of the Elo forward pass.

    k_ref    : SMEM scalar, k = ln(c) / d (precomputed in the wrapper).
    home_ref : (C, TN) VMEM tile of home ratings.
    away_ref : (C, TN) VMEM tile of away ratings.
    out_ref  : (2*C, TN) VMEM tile; rows [0, C) = E_A, rows [C, 2C) = E_H.
    """
    k = k_ref[0]

    diff = away_ref[...] - home_ref[...]          # VPU
    e = jnp.exp(diff * k)                         # EUP: c**((a-h)/d) = exp((a-h)*k)
    e_h = pl.reciprocal(1.0 + e, approx=False)    # exact, keeps 1e-5 match vs torch
    e_a = 1.0 - e_h

    C = home_ref.shape[0]
    if (2 * C) % 8 == 0:
        # Single dense store -> unmasked vst (one full 8-sublane tile for C=4).
        out_ref[...] = jnp.concatenate([e_a, e_h], axis=0)
    else:
        # Fallback: half-tile stores (masked vst) when 2*C is not sublane-dense.
        out_ref[0:C, :] = e_a
        out_ref[C:2 * C, :] = e_h


def _round_down(x, m):
    return (x // m) * m


def _round_up(x, m):
    return ((x + m - 1) // m) * m


def _select_tn(C, N, *, vmem_budget_bytes=24 * 1024 * 1024, tile_cap_lanes=65536):
    """Pick the lane-tile width.

    Byte budget accounts for sublane padding (C padded to 8) and double
    buffering of both inputs and the output; the cap keeps the footprint well
    under the 32 MiB scoped VMEM limit on every generation (incl. v7x 64 MiB).
    """
    if N <= 2 * _LANE:
        return N  # single full-extent block (always legal, tiny)

    c_pad = _round_up(C, 8)
    out_pad = _round_up(2 * C, 8)
    # 2 inputs + 1 output, f32, double-buffered.
    bytes_per_lane = (2 * c_pad + out_pad) * 4 * 2
    cap = _round_down(vmem_budget_bytes // bytes_per_lane, _LANE)
    cap = max(_LANE, min(cap, tile_cap_lanes))

    # Keep >= 2 grid steps so a "parallel" grid axis feeds both v7x cores.
    half = max(_LANE, _round_down(N // 2, _LANE))
    return min(cap, half)


def elo_forward(home, away, c, d):
    """Pallas implementation of EloLayer.forward.

    home, away: (C, N) float32
    c, d      : python floats / 0-d scalars (the layer's hyper-parameters)
    returns   : (2*C, N) float32  == cat([E_A, E_H], axis=0)
    """
    assert home.shape == away.shape
    C, N = home.shape

    # TODO(synk): torch.pow(c, x) is reproduced via exp(x*ln(c)), valid only for
    # c > 0 (c defaults to 10.0; a learnable c that drifts <= 0 would NaN here).
    # Large |away-home|*k overflows exp to inf -> E_H == 0 exactly, which
    # matches torch's c**x saturation behaviour for c > 0.
    k = jnp.asarray(
        [jnp.log(jnp.float32(c)) / jnp.float32(d)], dtype=jnp.float32
    )

    tn = _select_tn(C, N)
    grid = (pl.cdiv(N, tn),)

    return pl.pallas_call(
        _elo_kernel,
        out_shape=jax.ShapeDtypeStruct((2 * C, N), home.dtype),
        grid=grid,
        in_specs=[
            pl.BlockSpec(memory_space=pltpu.SMEM),        # k scalar
            pl.BlockSpec((C, tn), lambda j: (0, j)),      # home tile
            pl.BlockSpec((C, tn), lambda j: (0, j)),      # away tile
        ],
        out_specs=pl.BlockSpec((2 * C, tn), lambda j: (0, j)),
        compiler_params=pltpu.CompilerParams(
            dimension_semantics=("parallel",),            # megacore split on v7x
            vmem_limit_bytes=32 * 1024 * 1024,            # safe on all generations
        ),
    )(k, home, away)


def _reference(home, away, c, d):
    e_h = 1.0 / (1.0 + jnp.power(jnp.float32(c), (away - home) / jnp.float32(d)))
    return jnp.concatenate([1.0 - e_h, e_h], axis=0)


if __name__ == "__main__":
    # Deterministic parameter init matching EloLayer.__init__ defaults.
    in_channels = 4
    c_param = 10.0     # nn.Parameter(torch.tensor(10.0))
    d_param = 400.0    # nn.Parameter(torch.tensor(400.0))

    key = jax.random.PRNGKey(0)
    kh, ka = jax.random.split(key)

    def _mk(n):
        h = 1500.0 + 200.0 * jax.random.normal(kh, (in_channels, n), dtype=jnp.float32)
        a = 1500.0 + 200.0 * jax.random.normal(ka, (in_channels, n), dtype=jnp.float32)
        return h, a

    # Test 1: N = 1024 -> tn = 512, grid = 2 (exercises the pipelined/parallel path).
    N = 1024
    home, away = _mk(N)
    out = jax.block_until_ready(elo_forward(home, away, c_param, d_param))
    ref = _reference(home, away, c_param, d_param)
    assert out.shape == (2 * in_channels, N)
    assert out.dtype == jnp.float32
    assert jnp.allclose(out, ref, atol=1e-5, rtol=1e-5), "mismatch vs reference (N=1024)"

    # Test 2: ragged N = 640 -> tn = 256, grid = 3 with a masked partial last block.
    N2 = 640
    home2, away2 = _mk(N2)
    out2 = jax.block_until_ready(elo_forward(home2, away2, c_param, d_param))
    ref2 = _reference(home2, away2, c_param, d_param)
    assert out2.shape == (2 * in_channels, N2)
    assert jnp.allclose(out2, ref2, atol=1e-5, rtol=1e-5), "mismatch vs reference (N=640)"

    # Test 3: small N = 96 -> single full-extent block path.
    N3 = 96
    home3, away3 = _mk(N3)
    out3 = jax.block_until_ready(elo_forward(home3, away3, c_param, d_param))
    ref3 = _reference(home3, away3, c_param, d_param)
    assert out3.shape == (2 * in_channels, N3)
    assert jnp.allclose(out3, ref3, atol=1e-5, rtol=1e-5), "mismatch vs reference (N=96)"

    print("KERNEL_OK")
</pallas_src>

<mosaic_0001>
module attributes {stable_mosaic.version = 11 : i64} {
  func.func @_elo_kernel(%arg0: i32, %arg1: memref<1xf32, #tpu.memory_space<smem>>, %arg2: memref<4x512xf32, #tpu.memory_space<vmem>>, %arg3: memref<4x512xf32, #tpu.memory_space<vmem>>, %arg4: memref<8x512xf32, #tpu.memory_space<vmem>>) attributes {dimension_semantics = [#tpu.dimension_semantics<parallel>], iteration_bounds = array<i64: 2>, scalar_prefetch = 0 : i64, scratch_operands = 0 : i64, tpu.core_type = #tpu.core_type<tc>, window_params = [{transform_indices = @transform_0, window_bounds = array<i64: 1>}, {transform_indices = @transform_1, window_bounds = array<i64: 4, 512>}, {transform_indices = @transform_2, window_bounds = array<i64: 4, 512>}, {transform_indices = @transform_3, window_bounds = array<i64: 8, 512>}]} {
    %c0 = arith.constant 0 : index
    %0 = memref.load %arg1[%c0] : memref<1xf32, #tpu.memory_space<smem>>
    %c0_0 = arith.constant 0 : index
    %c0_1 = arith.constant 0 : index
    %1 = vector.load %arg3[%c0_0, %c0_1] : memref<4x512xf32, #tpu.memory_space<vmem>>, vector<4x512xf32>
    %c0_2 = arith.constant 0 : index
    %c0_3 = arith.constant 0 : index
    %2 = vector.load %arg2[%c0_2, %c0_3] : memref<4x512xf32, #tpu.memory_space<vmem>>, vector<4x512xf32>
    %3 = arith.subf %1, %2 : vector<4x512xf32>
    %4 = vector.broadcast %0 : f32 to vector<4x512xf32>
    %5 = arith.mulf %3, %4 : vector<4x512xf32>
    %6 = math.exp %5 : vector<4x512xf32>
    %cst = arith.constant 1.000000e+00 : f32
    %7 = vector.broadcast %cst : f32 to vector<4x512xf32>
    %8 = arith.addf %7, %6 : vector<4x512xf32>
    %9 = tpu.reciprocal %8 : vector<4x512xf32> -> vector<4x512xf32>
    %cst_4 = arith.constant 1.000000e+00 : f32
    %10 = vector.broadcast %cst_4 : f32 to vector<4x512xf32>
    %11 = arith.subf %10, %9 : vector<4x512xf32>
    %12 = tpu.concatenate %11, %9 in 0 : vector<4x512xf32>, vector<4x512xf32> -> vector<8x512xf32>
    %c0_5 = arith.constant 0 : index
    %c0_6 = arith.constant 0 : index
    %13 = vector.load %arg4[%c0_5, %c0_6] : memref<8x512xf32, #tpu.memory_space<vmem>>, vector<8x512xf32>
    tpu.vector_store %arg4[%c0_5, %c0_6], %12 {strides = array<i32>} : memref<8x512xf32, #tpu.memory_space<vmem>>, vector<8x512xf32>,
    return
  }
  func.func @transform_0(%arg0: i32) -> i32 {
    %c0_i32 = arith.constant 0 : i32
    %c0_i32_0 = arith.constant 0 : i32
    return %c0_i32 : i32
  }
  func.func @transform_1(%arg0: i32) -> (i32, i32) {
    %c0_i32 = arith.constant 0 : i32
    %c0_i32_0 = arith.constant 0 : i32
    return %c0_i32, %arg0 : i32, i32
  }
  func.func @transform_2(%arg0: i32) -> (i32, i32) {
    %c0_i32 = arith.constant 0 : i32
    %c0_i32_0 = arith.constant 0 : i32
    return %c0_i32, %arg0 : i32, i32
  }
  func.func @transform_3(%arg0: i32) -> (i32, i32) {
    %c0_i32 = arith.constant 0 : i32
    %c0_i32_0 = arith.constant 0 : i32
    return %c0_i32, %arg0 : i32, i32
  }
}

</mosaic_0001>

<llo_original>
// kernel: tpu_custom_call.1
$region0: #{tpu_custom_call.1}
  #allocation0 [shape = 'u32[]', space=smem, size = 0x4, offset = 0x4, fixed_abs, tag = 'smem constant byte address 0x4 - core index']
  #allocation1 [shape = 'u32[144,128]{1,0:T(1,128)}', space=vmem, size = 0x12000, scoped, tag = 'internal scratch']
  #allocation2 [shape = 'f32[1]{0:T(128)S(6)}', space=smem, size = 0x200, scoped, tag = 'scoped memory for tpu_custom_call.1']
  %s0 = inlined_call_operand.<no memory space> [shape: f32[1], index: 0, kind: input, shape index: {}]
  %s1 = inlined_call_operand.hbm [shape: f32[4,1024], index: 1, kind: input, shape index: {}]
  %s2 = inlined_call_operand.hbm [shape: f32[4,1024], index: 2, kind: input, shape index: {}]
  %s3 = inlined_call_operand.hbm [shape: f32[8,1024], index: 3, kind: output, shape index: {}]
  %s4 = sld [smem:[#allocation0]]
  $region53: #{tpu_custom_call.1} parent=0
    _
  %s6 = ssub.s32 1, %s4
  %s7 = scalar_select 0, %s6, %s4
  %8 = sst [smem:[#allocation2]] %s0
  $region1: #{tpu_custom_call.1} parent=0
    #allocation3 [shape = 'u8[16384]{0}', space=vmem, size = 0x4000, scoped, tag = 'input window, operand 1']
    #allocation4 [shape = 's32[2]{0}', space=sflag, size = 0x8, scoped, tag = 'scoped memory for tpu_custom_call.1']
    #allocation5 [shape = 's32[2]{0}', space=sflag, size = 0x8, scoped, tag = 'scoped memory for tpu_custom_call.1']
    #allocation6 [shape = 'u8[16384]{0}', space=vmem, size = 0x4000, scoped, tag = 'input window, operand 2']
    #allocation7 [shape = 's32[2]{0}', space=sflag, size = 0x8, scoped, tag = 'scoped memory for tpu_custom_call.1']
    #allocation8 [shape = 'u8[32768]{0}', space=vmem, size = 0x8000, scoped, tag = 'output window, operand 0']
    %9 = vsyncpa [#allocation4], 0
    %s10 = scalar_lea.sflag [#allocation4], 1
    %11 = vsyncpa %s10, 0
    %12 = vsyncpa [#allocation7], 0
    %s13 = scalar_lea.sflag [#allocation7], 1
    %14 = vsyncpa %s13, 0
    %15 = vsyncpa [#allocation5], 0
    %s16 = scalar_lea.sflag [#allocation5], 1
    %17 = vsyncpa %s16, 0
    loop: start=0, step=1, limit=4
    $region2: #{tpu_custom_call.1} parent=1 // loop_pre_header
      _
    $region3: #{tpu_custom_call.1} parent=1 // loop_header
      %s19 = sphi 0, %s23
      %p20 = scmp.ge.s32.totalorder %s19, 4
      %s27 = sphi 0, %s27
      %s29 = sphi 0, %s27
      %s30 = sphi 0, %s29
      %s44 = sphi 0, %s30
      %s50 = sphi 0, %s52
      %s53 = sphi 0, %s50
      %s54 = sphi 0, %s53
      %s70 = sphi 0, %s54
      %s76 = sphi 0, %s78
      %s79 = sphi 0, %s76
      %s80 = sphi 0, %s79
      %s96 = sphi 0, %s80
      %s102 = sphi 0, %s104
      %s105 = sphi 0, %s102
      %s106 = sphi 0, %s105
      %s122 = sphi 0, %s106
    $region4: #{tpu_custom_call.1} parent=1 // loop_header_branch
      %22 = sbr.rel (%p20) target = $region8
    $region5: #{tpu_custom_call.1} parent=1 // loop_body
      %s24 = ssub.s32 %s19, 1
      %s25 = ssub.s32 %s19, 2
      %s26 = sadd.s32 %s19, 1
      %s28 = sadd.s32 %s27, 1
      %p31 = scmp.eq.s32.totalorder %s19, 1
      %p32 = scmp.ne.s32.totalorder %s27, %s29
      %p33 = scmp.eq.s32.totalorder %s19, 0
      %p34 = por %p32, %p33
      %p35 = scmp.ne.s32.totalorder %s27, %s29
      %p36 = scmp.eq.s32.totalorder %s24, 1
      %p37 = por %p35, %p36
      %p38 = scmp.ne.s32.totalorder %s29, %s30
      %p39 = scmp.eq.s32.totalorder %s24, 0
      %p40 = por %p38, %p39
      %p41 = scmp.ne.s32.totalorder %s29, %s30
      %p42 = scmp.eq.s32.totalorder %s25, 1
      %p43 = por %p41, %p42
      %p45 = scmp.ne.s32.totalorder %s30, %s44
      %p46 = scmp.eq.s32.totalorder %s25, 0
      %p47 = por %p45, %p46
      %s48 = ssub.s32 %s19, %s26
      %p49 = scmp.eq.s32.totalorder %s48, 0
      %s51 = sadd.s32 %s50, 1
      %s52 = scalar_select %p49, %s50, %s51
      %p55 = pneg %p49
      %p56 = scmp.eq.s32.totalorder %s19, 1
      %p57 = por %p55, %p56
      %p58 = scmp.ne.s32.totalorder %s50, %s53
      %p59 = scmp.eq.s32.totalorder %s19, 0
      %p60 = por %p58, %p59
      %p61 = scmp.ne.s32.totalorder %s50, %s53
      %p62 = scmp.eq.s32.totalorder %s24, 1
      %p63 = por %p61, %p62
      %p64 = scmp.ne.s32.totalorder %s53, %s54
      %p65 = scmp.eq.s32.totalorder %s24, 0
      %p66 = por %p64, %p65
      %p67 = scmp.ne.s32.totalorder %s53, %s54
      %p68 = scmp.eq.s32.totalorder %s25, 1
      %p69 = por %p67, %p68
      %p71 = scmp.ne.s32.totalorder %s54, %s70
      %p72 = scmp.eq.s32.totalorder %s25, 0
      %p73 = por %p71, %p72
      %s74 = ssub.s32 %s19, %s26
      %p75 = scmp.eq.s32.totalorder %s74, 0
      %s77 = sadd.s32 %s76, 1
      %s78 = scalar_select %p75, %s76, %s77
      %p81 = pneg %p75
      %p82 = scmp.eq.s32.totalorder %s19, 1
      %p83 = por %p81, %p82
      %p84 = scmp.ne.s32.totalorder %s76, %s79
      %p85 = scmp.eq.s32.totalorder %s19, 0
      %p86 = por %p84, %p85
      %p87 = scmp.ne.s32.totalorder %s76, %s79
      %p88 = scmp.eq.s32.totalorder %s24, 1
      %p89 = por %p87, %p88
      %p90 = scmp.ne.s32.totalorder %s79, %s80
      %p91 = scmp.eq.s32.totalorder %s24, 0
      %p92 = por %p90, %p91
      %p93 = scmp.ne.s32.totalorder %s79, %s80
      %p94 = scmp.eq.s32.totalorder %s25, 1
      %p95 = por %p93, %p94
      %p97 = scmp.ne.s32.totalorder %s80, %s96
      %p98 = scmp.eq.s32.totalorder %s25, 0
      %p99 = por %p97, %p98
      %s100 = ssub.s32 %s19, %s26
      %p101 = scmp.eq.s32.totalorder %s100, 0
      %s103 = sadd.s32 %s102, 1
      %s104 = scalar_select %p101, %s102, %s103
      %p107 = pneg %p101
      %p108 = scmp.eq.s32.totalorder %s19, 1
      %p109 = por %p107, %p108
      %p110 = scmp.ne.s32.totalorder %s102, %s105
      %p111 = scmp.eq.s32.totalorder %s19, 0
      %p112 = por %p110, %p111
      %p113 = scmp.ne.s32.totalorder %s102, %s105
      %p114 = scmp.eq.s32.totalorder %s24, 1
      %p115 = por %p113, %p114
      %p116 = scmp.ne.s32.totalorder %s105, %s106
      %p117 = scmp.eq.s32.totalorder %s24, 0
      %p118 = por %p116, %p117
      %p119 = scmp.ne.s32.totalorder %s105, %s106
      %p120 = scmp.eq.s32.totalorder %s25, 1
      %p121 = por %p119, %p120
      %p123 = scmp.ne.s32.totalorder %s106, %s122
      %p124 = scmp.eq.s32.totalorder %s25, 0
      %p125 = por %p123, %p124
      %p126 = scmp.le.s32.totalorder 1, %s19
      %p127 = scmp.lt.s32.totalorder %s19, 3
      %p128 = pnand %p126, %p127
      %p129 = pneg %p128
      // Predicated region
      $region9: #{tpu_custom_call.1} parent=5 // pred_check
        _
      $region10: #{tpu_custom_call.1} parent=5 // pred_check_branch
        %131 = sbr.rel (%p128) target = $region12
      $region11: #{tpu_custom_call.1} parent=5 // pred_region
        %s132 = ssub.s32 %s19, 1
        // Predicated region
        $region13: #{tpu_custom_call.1} parent=11 // pred_check
          %p133 = pneg %p40
        $region14: #{tpu_custom_call.1} parent=11 // pred_check_branch
          %135 = sbr.rel (%p133) target = $region16
        $region15: #{tpu_custom_call.1} parent=11 // pred_region
          _
        $region16: #{tpu_custom_call.1} parent=11 // pred_fallthru
          _
      $region12: #{tpu_custom_call.1} parent=5 // pred_fallthru
        _
      %p136 = scmp.lt.s32.totalorder %s19, 2
      // Predicated region
      $region17: #{tpu_custom_call.1} parent=5 // pred_check
        %p137 = pneg %p136
      $region18: #{tpu_custom_call.1} parent=5 // pred_check_branch
        %139 = sbr.rel (%p137) target = $region20
      $region19: #{tpu_custom_call.1} parent=5 // pred_region
        // Predicated region
        $region21: #{tpu_custom_call.1} parent=19 // pred_check
          %p140 = pneg %p60
        $region22: #{tpu_custom_call.1} parent=19 // pred_check_branch
          %142 = sbr.rel (%p140) target = $region24
        $region23: #{tpu_custom_call.1} parent=19 // pred_region
          %s143 = sand.u32 %s50, 1
          %s144 = scalar_lea.sflag [#allocation4], %s143
          %s145 = sand.u32 %s50, 1
          %s146 = smul.addr %s145, 16
          %s147 = scalar_lea.vmem [#allocation3], %s146
          %s148 = smul.u32 4, %s19
          %s150 = ssub.s32 256, 256
          %151 = vsyncadd %s144, %s150
          %s152 = smul.addr %s148, 64
          %s153 = scalar_lea.hbm %s1, %s152
          %s155 = sshll.u32 %s147, 4
          %s156 = int_to_ptr.vmem [resolvable:$true] %s155
          %158 = dma.hbm_to_vmem [thread:$0]  %s153, 256, %s156, %s144
        $region24: #{tpu_custom_call.1} parent=19 // pred_fallthru
          _
        // Predicated region
        $region25: #{tpu_custom_call.1} parent=19 // pred_check
          %p159 = pneg %p86
        $region26: #{tpu_custom_call.1} parent=19 // pred_check_branch
          %161 = sbr.rel (%p159) target = $region28
        $region27: #{tpu_custom_call.1} parent=19 // pred_region
          %s162 = sand.u32 %s76, 1
          %s163 = scalar_lea.sflag [#allocation7], %s162
          %s164 = sand.u32 %s76, 1
          %s165 = smul.addr %s164, 16
          %s166 = scalar_lea.vmem [#allocation6], %s165
          %s167 = smul.u32 4, %s19
          %s169 = ssub.s32 256, 256
          %170 = vsyncadd %s163, %s169
          %s171 = smul.addr %s167, 64
          %s172 = scalar_lea.hbm %s2, %s171
          %s174 = sshll.u32 %s166, 4
          %s175 = int_to_ptr.vmem [resolvable:$true] %s174
          %177 = dma.hbm_to_vmem [thread:$0]  %s172, 256, %s175, %s163
        $region28: #{tpu_custom_call.1} parent=19 // pred_fallthru
          _
      $region20: #{tpu_custom_call.1} parent=5 // pred_fallthru
        _
      %p178 = scmp.le.s32.totalorder 1, %s19
      %p179 = scmp.lt.s32.totalorder %s19, 3
      %p180 = pnand %p178, %p179
      %p181 = pneg %p180
      // Predicated region
      $region29: #{tpu_custom_call.1} parent=5 // pred_check
        _
      $region30: #{tpu_custom_call.1} parent=5 // pred_check_branch
        %183 = sbr.rel (%p180) target = $region32
      $region31: #{tpu_custom_call.1} parent=5 // pred_region
        %s184 = ssub.s32 %s19, 1
        %s185 = sand.u32 %s53, 1
        %s186 = scalar_lea.sflag [#allocation4], %s185
        %s187 = sand.u32 %s53, 1
        %s188 = smul.addr %s187, 16
        %s189 = scalar_lea.vmem [#allocation3], %s188
        // Predicated region
        $region33: #{tpu_custom_call.1} parent=31 // pred_check
          %p190 = pneg %p66
        $region34: #{tpu_custom_call.1} parent=31 // pred_check_branch
          %192 = sbr.rel (%p190) target = $region36
        $region35: #{tpu_custom_call.1} parent=31 // pred_region
          %193 = dma.done %s186, 256
        $region36: #{tpu_custom_call.1} parent=31 // pred_fallthru
          _
        %s194 = sand.u32 %s79, 1
        %s195 = scalar_lea.sflag [#allocation7], %s194
        %s196 = sand.u32 %s79, 1
        %s197 = smul.addr %s196, 16
        %s198 = scalar_lea.vmem [#allocation6], %s197
        // Predicated region
        $region37: #{tpu_custom_call.1} parent=31 // pred_check
          %p199 = pneg %p92
        $region38: #{tpu_custom_call.1} parent=31 // pred_check_branch
          %201 = sbr.rel (%p199) target = $region40
        $region39: #{tpu_custom_call.1} parent=31 // pred_region
          %202 = dma.done %s195, 256
        $region40: #{tpu_custom_call.1} parent=31 // pred_fallthru
          _
        %p203 = pneg %p40
        %p204 = pneg %p37
        %s205 = sand.u32 %s53, 1
        %s206 = scalar_lea.sflag [#allocation4], %s205
        %s207 = sand.u32 %s53, 1
        %s208 = smul.addr %s207, 16
        %s209 = scalar_lea.vmem [#allocation3], %s208
        %p210 = pneg %p66
        %p211 = pneg %p63
        %s212 = sand.u32 %s79, 1
        %s213 = scalar_lea.sflag [#allocation7], %s212
        %s214 = sand.u32 %s79, 1
        %s215 = smul.addr %s214, 16
        %s216 = scalar_lea.vmem [#allocation6], %s215
        %p217 = pneg %p92
        %p218 = pneg %p89
        %p219 = pneg %p118
        %p220 = pneg %p115
        %s221 = sand.u32 %s105, 1
        %s222 = scalar_lea.sflag [#allocation5], %s221
        %s223 = sand.u32 %s105, 1
        %s224 = smul.addr %s223, 32
        %s225 = scalar_lea.vmem [#allocation8], %s224
        %s226 = smul.u32 4, %s24
        %s227 = smul.u32 4, %s24
        %s228 = smul.u32 4, %s24
        %s229 = sld [smem:[#allocation2]]
        %v230 = vld [vmem:[%s198] sm:$0xff]
        %v231 = vld [vmem:[%s198 + $0x8] sm:$0xff]
        %v232 = vld [vmem:[%s189] sm:$0xff]
        %v233 = vld [vmem:[%s189 + $0x8] sm:$0xff]
        %v234 = vsub.f32 %v230, %v232
        %v235 = vsub.f32 %v231, %v233
        %v236 = vstv %s229
        %v237 = vmul.f32 %v234, %v236
        %v238 = vmul.f32 %v235, %v236
        %v239 = vmul.f32 %v237, 1.442695
        %v240 = vpow.pop %v239
        %v241 = vmul.f32 %v238, 1.442695
        %v242 = vpow.pop %v241
        %v243 = vadd.f32 %v240, 1.0
        %v244 = vadd.f32 %v242, 1.0
        %v245 = vrcp.pop %v243
        %v246 = vrcp.pop %v244
        %v247 = vsub.f32 1.0, %v245
        %v248 = vsub.f32 1.0, %v246
        %v251 = vcombine.high %v247, %v247
        %v252 = vcombine.high %v248, %v248
        %v257 = vcombine.low %v245, %v245
        %v258 = vcombine.low %v246, %v246
        %vm261 = vcmask 1043456
        %v262 = vsel %vm261, %v247, %v257
        %v263 = vsel %vm261, %v251, %v245
        %v264 = vsel %vm261, %v248, %v258
        %v265 = vsel %vm261, %v252, %v246
        %266 = vst [vmem:[%s225] sm:$0xff] %v262
        %267 = vst [vmem:[%s225 + $0x8] sm:$0xff] %v263
        %268 = vst [vmem:[%s225 + $0x10] sm:$0xff] %v264
        %269 = vst [vmem:[%s225 + $0x18] sm:$0xff] %v265
        %s270 = sand.u32 %s105, 1
        %s271 = scalar_lea.sflag [#allocation5], %s270
        %s272 = sand.u32 %s105, 1
        %s273 = smul.addr %s272, 32
        %s274 = scalar_lea.vmem [#allocation8], %s273
        // Predicated region
        $region41: #{tpu_custom_call.1} parent=31 // pred_check
          %p275 = pneg %p115
        $region42: #{tpu_custom_call.1} parent=31 // pred_check_branch
          %277 = sbr.rel (%p275) target = $region44
        $region43: #{tpu_custom_call.1} parent=31 // pred_region
          %s278 = smul.u32 4, %s24
          %s280 = ssub.s32 512, 512
          %281 = vsyncadd %s271, %s280
          %s282 = smul.addr %s278, 128
          %s283 = scalar_lea.hbm %s3, %s282
          %s285 = sshll.u32 %s274, 4
          %s286 = int_to_ptr.vmem [resolvable:$true] %s285
          %288 = dma.vmem_to_hbm [thread:$0]  %s286, 512, %s283, %s271
        $region44: #{tpu_custom_call.1} parent=31 // pred_fallthru
          _
      $region32: #{tpu_custom_call.1} parent=5 // pred_fallthru
        _
      %p289 = scmp.le.s32.totalorder 2, %s19
      // Predicated region
      $region45: #{tpu_custom_call.1} parent=5 // pred_check
        %p290 = pneg %p289
      $region46: #{tpu_custom_call.1} parent=5 // pred_check_branch
        %292 = sbr.rel (%p290) target = $region48
      $region47: #{tpu_custom_call.1} parent=5 // pred_region
        %s293 = ssub.s32 %s19, 2
        // Predicated region
        $region49: #{tpu_custom_call.1} parent=47 // pred_check
          %p294 = pneg %p121
        $region50: #{tpu_custom_call.1} parent=47 // pred_check_branch
          %296 = sbr.rel (%p294) target = $region52
        $region51: #{tpu_custom_call.1} parent=47 // pred_region
          %s297 = sand.u32 %s106, 1
          %s298 = scalar_lea.sflag [#allocation5], %s297
          %s299 = sand.u32 %s106, 1
          %s300 = smul.addr %s299, 32
          %s301 = scalar_lea.vmem [#allocation8], %s300
          %302 = dma.done %s298, 512
        $region52: #{tpu_custom_call.1} parent=47 // pred_fallthru
          _
      $region48: #{tpu_custom_call.1} parent=5 // pred_fallthru
        _
    $region6: #{tpu_custom_call.1} parent=1 // loop_footer
      %s23 = sadd.s32 1, %s19
    $region7: #{tpu_custom_call.1} parent=1 // loop_footer_branch
      %18 = sbr.rel target = $region3
    $region8: #{tpu_custom_call.1} parent=1 // loop_exit
      _
    %303 = vsyncpa [#allocation4], 1
    %s304 = scalar_lea.sflag [#allocation4], 1
    %305 = vsyncpa %s304, 1
    %306 = vsyncpa [#allocation7], 1
    %s307 = scalar_lea.sflag [#allocation7], 1
    %308 = vsyncpa %s307, 1
    %309 = vsyncpa [#allocation5], 1
    %s310 = scalar_lea.sflag [#allocation5], 1
    %311 = vsyncpa %s310, 1

</llo_original>
